<compile_context>
chip_gen: v7x
topology: tpu7x:2x2x1
jax: 0.10.0
libtpu: 0.0.40
codegen_flags: <defaults>
</compile_context>

<pallas_src>
import jax
import jax.numpy as jnp
from jax.experimental import pallas as pl
from jax.experimental.pallas import tpu as pltpu


def _embed_kernel(ids_ref, tab_ref, pos_ref, out_ref):
    # ids_ref: VMEM (1, TS, 1) int32  -- token ids for this (batch, seq-tile)
    # tab_ref: VMEM (V, D)            -- full embedding table (resident)
    # pos_ref: VMEM (TS, D)           -- positional rows for this seq tile
    # out_ref: VMEM (1, TS, D)
    ids = ids_ref[0]                                   # (TS, 1) int32
    ts = ids.shape[0]
    v = tab_ref.shape[0]

    # One-hot gather on the (otherwise idle) MXU: onehot[t, i] = (ids[t] == i).
    iota_v = jax.lax.broadcasted_iota(jnp.int32, (ts, v), 1)
    onehot = (iota_v == ids).astype(tab_ref.dtype)     # (TS, V)
    emb = jnp.dot(onehot, tab_ref[...],
                  preferred_element_type=jnp.float32,
                  precision=jax.lax.Precision.HIGHEST)  # (TS, D) f32

    out_ref[0] = (emb + pos_ref[...].astype(jnp.float32)).astype(out_ref.dtype)


def _pick_seq_tile(seq_len):
    for cand in (512, 256, 128, 64, 32, 16, 8):
        if seq_len % cand == 0:
            return cand
    return seq_len


def transformer_embedding(x, tok_emb_table, pos_enc_table, drop_prob=0.0,
                          train=False, rng=None):
    """x: (B, S) int token ids. Returns (B, S, D) in the table's dtype."""
    B, S = x.shape
    V, D = tok_emb_table.shape
    max_len = pos_enc_table.shape[0]
    assert S <= max_len, f"sequence length {S} exceeds max_len {max_len}"

    TS = _pick_seq_tile(S)
    assert S % TS == 0, "sequence length must be divisible by the seq tile"
    num_tiles = S // TS

    ids3 = x.astype(jnp.int32).reshape(B, S, 1)

    itemsize = tok_emb_table.dtype.itemsize
    out_dtype = tok_emb_table.dtype

    grid_spec = pltpu.PrefetchScalarGridSpec(
        num_scalar_prefetch=0,
        grid=(num_tiles, B),          # batch is the inner axis -> pos/table blocks revisited
        in_specs=[
            # token ids for this (seq tile, batch) block
            pl.BlockSpec((1, TS, 1), lambda si, b: (b, si, 0)),
            # full embedding table, VMEM-resident (constant block index)
            pl.BlockSpec((V, D), lambda si, b: (0, 0)),
            # positional rows for this seq tile (independent of batch)
            pl.BlockSpec((TS, D), lambda si, b: (si, 0)),
        ],
        out_specs=pl.BlockSpec((1, TS, D), lambda si, b: (b, si, 0)),
    )

    # VMEM budget: double-buffered resident table + pipelined per-step tiles.
    vmem_limit_bytes = (2 * V * D * itemsize
                        + 2 * (TS * D * itemsize + TS * D * itemsize + TS * 4)
                        + (8 << 20))
    vmem_limit_bytes = int(min(max(vmem_limit_bytes, 32 << 20), 60 << 20))

    cost = pl.CostEstimate(
        flops=2 * B * S * V * D,
        transcendentals=0,
        bytes_accessed=(B * S * D * itemsize   # output write
                        + B * S * 4            # ids read
                        + V * D * itemsize     # table read (once)
                        + S * D * itemsize),   # pos read (once)
    )

    out = pl.pallas_call(
        _embed_kernel,
        out_shape=jax.ShapeDtypeStruct((B, S, D), out_dtype),
        grid_spec=grid_spec,
        compiler_params=pltpu.CompilerParams(
            dimension_semantics=("parallel", "arbitrary"),
            vmem_limit_bytes=vmem_limit_bytes),
        cost_estimate=cost,
    )(ids3, tok_emb_table, pos_enc_table)

    # Dropout: identity in eval mode (PyTorch nn.Dropout under model.eval()).
    if train and drop_prob > 0.0:
        # TODO(synk): fuse training-mode dropout into the kernel with
        # pltpu.prng_seed + pltpu.stateful_bernoulli to avoid an extra full
        # HBM read/write pass; kept as wrapper glue (not the eval hot path).
        keep = jax.random.bernoulli(rng, 1.0 - drop_prob, out.shape)
        out = jnp.where(keep, out / (1.0 - drop_prob), 0.0).astype(out_dtype)
    return out


def make_positional_encoding(max_len, d_model, dtype=jnp.float32):
    """Sinusoidal table, identical to the PyTorch PositionalEmbedding.__init__."""
    pos = jnp.arange(max_len, dtype=jnp.float32)[:, None]            # (L, 1)
    _2i = jnp.arange(0, d_model, 2, dtype=jnp.float32)               # (D/2,)
    angle = pos / jnp.power(10000.0, _2i / d_model)                  # (L, D/2)
    enc = jnp.zeros((max_len, d_model), dtype=jnp.float32)
    enc = enc.at[:, 0::2].set(jnp.sin(angle))
    enc = enc.at[:, 1::2].set(jnp.cos(angle))
    return enc.astype(dtype)


if __name__ == "__main__":
    # Small shapes consistent with the module's forward.
    vocab_size = 32
    d_model = 128      # lane-aligned
    max_len = 16
    drop_prob = 0.0    # eval-mode / identity dropout
    B, S = 2, 8

    key = jax.random.PRNGKey(0)
    k_emb, k_ids = jax.random.split(key)

    # nn.Embedding default init: N(0, 1)
    tok_emb_table = jax.random.normal(k_emb, (vocab_size, d_model),
                                      dtype=jnp.float32)
    pos_enc_table = make_positional_encoding(max_len, d_model)

    x = jax.random.randint(k_ids, (B, S), 0, vocab_size, dtype=jnp.int32)

    out = transformer_embedding(x, tok_emb_table, pos_enc_table,
                                drop_prob=drop_prob, train=False)
    out = jax.block_until_ready(out)

    # Reference check (pure JAX): tok_emb[x] + pos_enc[:S]
    ref = tok_emb_table[x] + pos_enc_table[:S][None, :, :]
    assert out.shape == (B, S, d_model)
    assert jnp.allclose(out, ref, atol=1e-5), "mismatch vs reference"

    print("KERNEL_OK")
</pallas_src>

<mosaic_0001>
module attributes {stable_mosaic.version = 11 : i64} {
  func.func @_embed_kernel(%arg0: i32, %arg1: i32, %arg2: memref<1x8x1xi32, #tpu.memory_space<vmem>>, %arg3: memref<32x128xf32, #tpu.memory_space<vmem>>, %arg4: memref<8x128xf32, #tpu.memory_space<vmem>>, %arg5: memref<1x8x128xf32, #tpu.memory_space<vmem>>) attributes {dimension_semantics = [#tpu.dimension_semantics<parallel>, #tpu.dimension_semantics<arbitrary>], iteration_bounds = array<i64: 1, 2>, scalar_prefetch = 0 : i64, scratch_operands = 0 : i64, tpu.core_type = #tpu.core_type<tc>, window_params = [{transform_indices = @transform_0, window_bounds = array<i64: 1, 8, 1>}, {pipeline_mode = #tpu.pipeline_mode<synchronous>, transform_indices = @transform_1, window_bounds = array<i64: 32, 128>}, {transform_indices = @transform_2, window_bounds = array<i64: 8, 128>}, {transform_indices = @transform_3, window_bounds = array<i64: 1, 8, 128>}]} {
    %c0 = arith.constant 0 : index
    %c0_0 = arith.constant 0 : index
    %c0_1 = arith.constant 0 : index
    %0 = vector.load %arg2[%c0, %c0_0, %c0_1] : memref<1x8x1xi32, #tpu.memory_space<vmem>>, vector<1x8x1xi32>
    %1 = vector.shape_cast %0 : vector<1x8x1xi32> to vector<8x1xi32>
    %2 = tpu.iota {dimensions = array<i32: 1>} : vector<8x32xi32>
    %3 = vector.broadcast %1 : vector<8x1xi32> to vector<8x32xi32>
    %4 = arith.cmpi eq, %2, %3 : vector<8x32xi32>
    %5 = arith.extui %4 : vector<8x32xi1> to vector<8x32xi32>
    %6 = arith.sitofp %5 : vector<8x32xi32> to vector<8x32xf32>
    %c0_2 = arith.constant 0 : index
    %c0_3 = arith.constant 0 : index
    %7 = vector.load %arg3[%c0_2, %c0_3] : memref<32x128xf32, #tpu.memory_space<vmem>>, vector<32x128xf32>
    %cst = arith.constant dense<0.000000e+00> : vector<8x128xf32>
    %8 = tpu.matmul %6, %7, %cst {dimension_numbers = #tpu.dot_dimension_numbers<[1], [0], [0], [1], [0, 0, 1, 1], [], []>, precision = #tpu.contract_precision<fp32>} : vector<8x32xf32>, vector<32x128xf32>, vector<8x128xf32> -> vector<8x128xf32>
    %c0_4 = arith.constant 0 : index
    %c0_5 = arith.constant 0 : index
    %9 = vector.load %arg4[%c0_4, %c0_5] : memref<8x128xf32, #tpu.memory_space<vmem>>, vector<8x128xf32>
    %10 = arith.addf %8, %9 : vector<8x128xf32>
    %c0_6 = arith.constant 0 : index
    %c0_7 = arith.constant 0 : index
    %c0_8 = arith.constant 0 : index
    %11 = vector.load %arg5[%c0_6, %c0_7, %c0_8] : memref<1x8x128xf32, #tpu.memory_space<vmem>>, vector<1x8x128xf32>
    %12 = vector.shape_cast %11 : vector<1x8x128xf32> to vector<8x128xf32>
    %13 = vector.shape_cast %10 : vector<8x128xf32> to vector<1x8x128xf32>
    tpu.vector_store %arg5[%c0_6, %c0_7, %c0_8], %13 {strides = array<i32>} : memref<1x8x128xf32, #tpu.memory_space<vmem>>, vector<1x8x128xf32>,
    return
  }
  func.func @transform_0(%arg0: i32, %arg1: i32) -> (i32, i32, i32) {
    %c0_i32 = arith.constant 0 : i32
    %c0_i32_0 = arith.constant 0 : i32
    return %arg1, %arg0, %c0_i32 : i32, i32, i32
  }
  func.func @transform_1(%arg0: i32, %arg1: i32) -> (i32, i32) {
    %c0_i32 = arith.constant 0 : i32
    %c0_i32_0 = arith.constant 0 : i32
    %c0_i32_1 = arith.constant 0 : i32
    return %c0_i32, %c0_i32_0 : i32, i32
  }
  func.func @transform_2(%arg0: i32, %arg1: i32) -> (i32, i32) {
    %c0_i32 = arith.constant 0 : i32
    %c0_i32_0 = arith.constant 0 : i32
    return %arg0, %c0_i32 : i32, i32
  }
  func.func @transform_3(%arg0: i32, %arg1: i32) -> (i32, i32, i32) {
    %c0_i32 = arith.constant 0 : i32
    %c0_i32_0 = arith.constant 0 : i32
    return %arg1, %arg0, %c0_i32 : i32, i32, i32
  }
}

</mosaic_0001>

<llo_original>
// kernel: tpu_custom_call.1
$region0: #{tpu_custom_call.1}
  #allocation0 [shape = 'u32[]', space=smem, size = 0x4, offset = 0x4, fixed_abs, tag = 'smem constant byte address 0x4 - core index']
  #allocation1 [shape = 'u32[144,128]{1,0:T(1,128)}', space=vmem, size = 0x12000, scoped, tag = 'internal scratch']
  %s0 = inlined_call_operand.vmem [shape: s32[2,8,1], index: 0, kind: input, shape index: {}]
  %s1 = inlined_call_operand.hbm [shape: f32[32,128], index: 1, kind: input, shape index: {}]
  %s2 = inlined_call_operand.vmem [shape: f32[16,128], index: 2, kind: input, shape index: {}]
  %s3 = inlined_call_operand.hbm [shape: f32[2,8,128], index: 3, kind: output, shape index: {}]
  %s4 = sld [smem:[#allocation0]]
  $region49: #{tpu_custom_call.1} parent=0
    _
  %s6 = ssub.s32 1, %s4
  %s7 = scalar_select 0, %s6, %s4
  $region1: #{tpu_custom_call.1} parent=0
    #allocation2 [shape = 'u8[16384]{0}', space=vmem, size = 0x4000, scoped, tag = 'input window, operand 1, single buffered']
    #allocation3 [shape = 's32[2]{0}', space=sflag, size = 0x8, scoped, tag = 'scoped memory for tpu_custom_call.1']
    #allocation4 [shape = 's32[2]{0}', space=sflag, size = 0x8, scoped, tag = 'scoped memory for tpu_custom_call.1']
    #allocation5 [shape = 'u8[8192]{0}', space=vmem, size = 0x2000, scoped, tag = 'output window, operand 0']
    %8 = vsyncpa [#allocation3], 0
    %9 = vsyncpa [#allocation4], 0
    %s10 = scalar_lea.sflag [#allocation4], 1
    %11 = vsyncpa %s10, 0
    loop: start=0, step=1, limit=4
    $region2: #{tpu_custom_call.1} parent=1 // loop_pre_header
      _
    $region3: #{tpu_custom_call.1} parent=1 // loop_header
      %s13 = sphi 0, %s17
      %p14 = scmp.ge.s32.totalorder %s13, 4
      %s20 = sphi 0, %s32
      %s21 = sphi 0, %s28
      %s22 = sphi 0, %s20
      %s23 = sphi 0, %s21
      %s24 = sphi 0, %s22
      %s25 = sphi 0, %s23
      %s37 = sphi 0, %s39
      %s40 = sphi 0, %s37
      %s41 = sphi 0, %s40
      %s57 = sphi 0, %s41
      %s61 = sphi 0, %s61
      %s63 = sphi 0, %s61
      %s64 = sphi 0, %s63
      %s78 = sphi 0, %s64
      %s84 = sphi 0, %s86
      %s87 = sphi 0, %s84
      %s88 = sphi 0, %s87
      %s104 = sphi 0, %s88
      %s112 = sphi 0, %s114
      %s115 = sphi 0, %s112
      %s116 = sphi 0, %s115
      %s132 = sphi 0, %s116
    $region4: #{tpu_custom_call.1} parent=1 // loop_header_branch
      %16 = sbr.rel (%p14) target = $region8
    $region5: #{tpu_custom_call.1} parent=1 // loop_body
      %s18 = ssub.s32 %s13, 1
      %s19 = ssub.s32 %s13, 2
      %s26 = sadd.s32 1, %s21
      %p27 = scmp.ge.s32.totalorder %s26, 2
      %s28 = scalar_select %p27, 0, %s26
      %s29 = sadd.s32 1, %s20
      %s30 = scalar_select %p27, %s29, %s20
      %p31 = scmp.ge.s32.totalorder %s30, 1
      %s32 = scalar_select %p31, 0, %s30
      %s33 = ssub.s32 %s21, %s28
      %s34 = ssub.s32 %s20, %s32
      %s35 = sor.u32 %s33, %s34
      %p36 = scmp.eq.s32.totalorder %s35, 0
      %s38 = sadd.s32 %s37, 1
      %s39 = scalar_select %p36, %s37, %s38
      %p42 = pneg %p36
      %p43 = scmp.eq.s32.totalorder %s13, 1
      %p44 = por %p42, %p43
      %p45 = scmp.ne.s32.totalorder %s37, %s40
      %p46 = scmp.eq.s32.totalorder %s13, 0
      %p47 = por %p45, %p46
      %p48 = scmp.ne.s32.totalorder %s37, %s40
      %p49 = scmp.eq.s32.totalorder %s18, 1
      %p50 = por %p48, %p49
      %p51 = scmp.ne.s32.totalorder %s40, %s41
      %p52 = scmp.eq.s32.totalorder %s18, 0
      %p53 = por %p51, %p52
      %p54 = scmp.ne.s32.totalorder %s40, %s41
      %p55 = scmp.eq.s32.totalorder %s19, 1
      %p56 = por %p54, %p55
      %p58 = scmp.ne.s32.totalorder %s41, %s57
      %p59 = scmp.eq.s32.totalorder %s19, 0
      %p60 = por %p58, %p59
      %s62 = sadd.s32 %s61, 1
      %p65 = scmp.eq.s32.totalorder %s13, 1
      %p66 = scmp.ne.s32.totalorder %s61, %s63
      %p67 = scmp.eq.s32.totalorder %s13, 0
      %p68 = por %p66, %p67
      %p69 = scmp.ne.s32.totalorder %s61, %s63
      %p70 = scmp.eq.s32.totalorder %s18, 1
      %p71 = por %p69, %p70
      %p72 = scmp.ne.s32.totalorder %s63, %s64
      %p73 = scmp.eq.s32.totalorder %s18, 0
      %p74 = por %p72, %p73
      %p75 = scmp.ne.s32.totalorder %s63, %s64
      %p76 = scmp.eq.s32.totalorder %s19, 1
      %p77 = por %p75, %p76
      %p79 = scmp.ne.s32.totalorder %s64, %s78
      %p80 = scmp.eq.s32.totalorder %s19, 0
      %p81 = por %p79, %p80
      %s82 = ssub.s32 %s20, %s32
      %p83 = scmp.eq.s32.totalorder %s82, 0
      %s85 = sadd.s32 %s84, 1
      %s86 = scalar_select %p83, %s84, %s85
      %p89 = pneg %p83
      %p90 = scmp.eq.s32.totalorder %s13, 1
      %p91 = por %p89, %p90
      %p92 = scmp.ne.s32.totalorder %s84, %s87
      %p93 = scmp.eq.s32.totalorder %s13, 0
      %p94 = por %p92, %p93
      %p95 = scmp.ne.s32.totalorder %s84, %s87
      %p96 = scmp.eq.s32.totalorder %s18, 1
      %p97 = por %p95, %p96
      %p98 = scmp.ne.s32.totalorder %s87, %s88
      %p99 = scmp.eq.s32.totalorder %s18, 0
      %p100 = por %p98, %p99
      %p101 = scmp.ne.s32.totalorder %s87, %s88
      %p102 = scmp.eq.s32.totalorder %s19, 1
      %p103 = por %p101, %p102
      %p105 = scmp.ne.s32.totalorder %s88, %s104
      %p106 = scmp.eq.s32.totalorder %s19, 0
      %p107 = por %p105, %p106
      %s108 = ssub.s32 %s21, %s28
      %s109 = ssub.s32 %s20, %s32
      %s110 = sor.u32 %s108, %s109
      %p111 = scmp.eq.s32.totalorder %s110, 0
      %s113 = sadd.s32 %s112, 1
      %s114 = scalar_select %p111, %s112, %s113
      %p117 = pneg %p111
      %p118 = scmp.eq.s32.totalorder %s13, 1
      %p119 = por %p117, %p118
      %p120 = scmp.ne.s32.totalorder %s112, %s115
      %p121 = scmp.eq.s32.totalorder %s13, 0
      %p122 = por %p120, %p121
      %p123 = scmp.ne.s32.totalorder %s112, %s115
      %p124 = scmp.eq.s32.totalorder %s18, 1
      %p125 = por %p123, %p124
      %p126 = scmp.ne.s32.totalorder %s115, %s116
      %p127 = scmp.eq.s32.totalorder %s18, 0
      %p128 = por %p126, %p127
      %p129 = scmp.ne.s32.totalorder %s115, %s116
      %p130 = scmp.eq.s32.totalorder %s19, 1
      %p131 = por %p129, %p130
      %p133 = scmp.ne.s32.totalorder %s116, %s132
      %p134 = scmp.eq.s32.totalorder %s19, 0
      %p135 = por %p133, %p134
      %p136 = scmp.le.s32.totalorder 1, %s13
      %p137 = scmp.lt.s32.totalorder %s13, 3
      %p138 = pnand %p136, %p137
      %p139 = pneg %p138
      // Predicated region
      $region9: #{tpu_custom_call.1} parent=5 // pred_check
        _
      $region10: #{tpu_custom_call.1} parent=5 // pred_check_branch
        %141 = sbr.rel (%p138) target = $region12
      $region11: #{tpu_custom_call.1} parent=5 // pred_region
        %s142 = ssub.s32 %s13, 1
        // Predicated region
        $region13: #{tpu_custom_call.1} parent=11 // pred_check
          %p143 = pneg %p74
        $region14: #{tpu_custom_call.1} parent=11 // pred_check_branch
          %145 = sbr.rel (%p143) target = $region16
        $region15: #{tpu_custom_call.1} parent=11 // pred_region
          %s147 = ssub.s32 512, 512
          %148 = vsyncadd [#allocation3], %s147
          %s149 = sshll.u32 [#allocation2], 4
          %s150 = int_to_ptr.vmem [resolvable:$true] %s149
          %155 = dma.hbm_to_vmem [thread:$0]  %s1, 512, %s150, [#allocation3], 128, 128, 8
        $region16: #{tpu_custom_call.1} parent=11 // pred_fallthru
          _
        // Predicated region
        $region17: #{tpu_custom_call.1} parent=11 // pred_check
          %p156 = pneg %p100
        $region18: #{tpu_custom_call.1} parent=11 // pred_check_branch
          %158 = sbr.rel (%p156) target = $region20
        $region19: #{tpu_custom_call.1} parent=11 // pred_region
          %p159 = scmp.lt.s32.totalorder %s22, 1
          %s160 = scalar_select %p159, %s22, 1
          %s161 = smul.addr %s160, 8
          %s162 = scalar_lea.vmem %s2, %s161
        $region20: #{tpu_custom_call.1} parent=11 // pred_fallthru
          _
      $region12: #{tpu_custom_call.1} parent=5 // pred_fallthru
        _
      %p163 = scmp.lt.s32.totalorder %s13, 2
      // Predicated region
      $region21: #{tpu_custom_call.1} parent=5 // pred_check
        %p164 = pneg %p163
      $region22: #{tpu_custom_call.1} parent=5 // pred_check_branch
        %166 = sbr.rel (%p164) target = $region24
      $region23: #{tpu_custom_call.1} parent=5 // pred_region
        // Predicated region
        $region25: #{tpu_custom_call.1} parent=23 // pred_check
          %p167 = pneg %p47
        $region26: #{tpu_custom_call.1} parent=23 // pred_check_branch
          %169 = sbr.rel (%p167) target = $region28
        $region27: #{tpu_custom_call.1} parent=23 // pred_region
          %p170 = scmp.lt.s32.totalorder %s21, 1
          %s171 = scalar_select %p170, %s21, 1
          %p172 = scmp.lt.s32.totalorder %s20, 0
          %s173 = scalar_select %p172, %s20, 0
          %s174 = sadd.s32 %s173, %s171
          %s175 = smul.addr %s174, 8
          %s176 = scalar_lea.vmem %s0, %s175
        $region28: #{tpu_custom_call.1} parent=23 // pred_fallthru
          _
      $region24: #{tpu_custom_call.1} parent=5 // pred_fallthru
        _
      %p177 = scmp.le.s32.totalorder 1, %s13
      %p178 = scmp.lt.s32.totalorder %s13, 3
      %p179 = pnand %p177, %p178
      %p180 = pneg %p179
      // Predicated region
      $region29: #{tpu_custom_call.1} parent=5 // pred_check
        _
      $region30: #{tpu_custom_call.1} parent=5 // pred_check_branch
        %182 = sbr.rel (%p179) target = $region32
      $region31: #{tpu_custom_call.1} parent=5 // pred_region
        %s183 = ssub.s32 %s13, 1
        // Predicated region
        $region33: #{tpu_custom_call.1} parent=31 // pred_check
          %p184 = pneg %p74
        $region34: #{tpu_custom_call.1} parent=31 // pred_check_branch
          %186 = sbr.rel (%p184) target = $region36
        $region35: #{tpu_custom_call.1} parent=31 // pred_region
          %187 = dma.done [#allocation3], 512
        $region36: #{tpu_custom_call.1} parent=31 // pred_fallthru
          _
        %p188 = scmp.lt.s32.totalorder %s23, 1
        %s189 = scalar_select %p188, %s23, 1
        %p190 = scmp.lt.s32.totalorder %s22, 0
        %s191 = scalar_select %p190, %s22, 0
        %s192 = sadd.s32 %s191, %s189
        %s193 = smul.addr %s192, 8
        %s194 = scalar_lea.vmem %s0, %s193
        %p195 = pneg %p53
        %p196 = pneg %p50
        %p197 = pneg %p74
        %p198 = pneg %p71
        %p199 = scmp.lt.s32.totalorder %s22, 1
        %s200 = scalar_select %p199, %s22, 1
        %s201 = smul.addr %s200, 8
        %s202 = scalar_lea.vmem %s2, %s201
        %p203 = pneg %p100
        %p204 = pneg %p97
        %p205 = pneg %p128
        %p206 = pneg %p125
        %s207 = sand.u32 %s115, 1
        %s208 = scalar_lea.sflag [#allocation4], %s207
        %s209 = sand.u32 %s115, 1
        %s210 = smul.addr %s209, 8
        %s211 = scalar_lea.vmem [#allocation5], %s210
        %p212 = scmp.lt.s32.totalorder %s23, 1
        %s213 = scalar_select %p212, %s23, 1
        %p214 = scmp.lt.s32.totalorder %s22, 0
        %s215 = scalar_select %p214, %s22, 0
        %s216 = sadd.s32 %s215, %s213
        %s217 = smul.addr %s216, 8
        %s218 = scalar_lea.vmem %s0, %s217
        %p219 = scmp.lt.s32.totalorder %s22, 1
        %s220 = scalar_select %p219, %s22, 1
        %s221 = smul.addr %s220, 8
        %s222 = scalar_lea.vmem %s2, %s221
        %v223 = vld [vmem:[%s218] sm:$0xff]
        %v224 = vlaneseq
        %v225 = vand.u32 %v224, 127
        %226 = vset.pattern.permute.xlu0 0
        %227 = vperm.xlu0 %226, %v223
        %v228 = vpop.permute.xlu0 %227
        %vm229 = vcmp.eq.s32.totalorder %v225, %v228
        %v230 = vsel %vm229, 1, 0
        %v231 = vcvt.s32.f32 %v230
        %v232 = vld [vmem:[#allocation2] sm:$0xff]
        %v233 = vld [vmem:[#allocation2 + $0x8] sm:$0xff]
        %v234 = vld [vmem:[#allocation2 + $0x10] sm:$0xff]
        %v235 = vld [vmem:[#allocation2 + $0x18] sm:$0xff]
        %v236 = vld [vmem:[%s222] sm:$0xff]
        %vm237 = vcmask 261120
        %v239 = vsel %vm237, %v231, 0
        %241 = vmatprep.subr.mxu0 0.0
        %v242 = vand.u32 %v232, 4294901760
        %243 = vmatpush1.msra.mxu0 %v242
        %244 = vmatprep.subr.mxu0 0.0
        %v245 = vand.u32 %v233, 4294901760
        %246 = vmatpush1.msra.mxu0 %v245
        %247 = vmatprep.subr.mxu0 0.0
        %v248 = vand.u32 %v234, 4294901760
        %249 = vmatpush1.msra.mxu0 %v248
        %250 = vmatprep.subr.mxu0 0.0
        %v251 = vand.u32 %v235, 4294901760
        %252 = vmatpush1.msra.mxu0 %v251
        %253 = vmatprep.subr.mxu0 0.0
        %254 = vmatpush1.msra.mxu0 0.0
        %255 = vmatprep.subr.mxu0 0.0
        %256 = vmatpush1.msra.mxu0 0.0
        %257 = vmatprep.subr.mxu0 0.0
        %258 = vmatpush1.msra.mxu0 0.0
        %259 = vmatprep.subr.mxu0 0.0
        %260 = vmatpush1.msra.mxu0 0.0
        %261 = vmatprep.subr.mxu0 0.0
        %262 = vmatpush1.msra.mxu0 0.0
        %263 = vmatprep.subr.mxu0 0.0
        %264 = vmatpush1.msra.mxu0 0.0
        %265 = vmatprep.subr.mxu0 0.0
        %266 = vmatpush1.msra.mxu0 0.0
        %267 = vmatprep.subr.mxu0 0.0
        %268 = vmatpush1.msra.mxu0 0.0
        %269 = vmatprep.subr.mxu0 0.0
        %270 = vmatpush1.msra.mxu0 0.0
        %271 = vmatprep.subr.mxu0 0.0
        %272 = vmatpush1.msra.mxu0 0.0
        %273 = vmatprep.subr.mxu0 0.0
        %274 = vmatpush1.msra.mxu0 0.0
        %275 = vmatprep.subr.mxu0 0.0
        %276 = vmatpush1.msra.mxu0 0.0
        %277 = vmatprep.subr.mxu0 0.0
        %278 = vmatpush1.msra.mxu0 0.0
        %279 = vmatprep.subr.mxu0 0.0
        %280 = vmatpush1.msra.mxu0 0.0
        %281 = vmatprep.subr.mxu0 0.0
        %282 = vmatpush1.msra.mxu0 0.0
        %283 = vmatprep.subr.mxu0 0.0
        %284 = vmatpush1.msra.mxu0 0.0
        %285 = vmatprep.subr.mxu0 0.0
        %286 = vmatpush1.msra.mxu0 0.0
        %287 = vmatprep.subr.mxu0 0.0
        %288 = vmatpush1.msra.mxu0 0.0
        %289 = vmatprep.subr.mxu0 0.0
        %290 = vmatpush1.msra.mxu0 0.0
        %291 = vmatprep.subr.mxu0 0.0
        %292 = vmatpush1.msra.mxu0 0.0
        %293 = vmatprep.subr.mxu0 0.0
        %294 = vmatpush1.msra.mxu0 0.0
        %295 = vmatprep.subr.mxu0 0.0
        %296 = vmatpush1.msra.mxu0 0.0
        %297 = vmatprep.subr.mxu0 0.0
        %298 = vmatpush1.msra.mxu0 0.0
        %299 = vmatprep.subr.mxu0 0.0
        %300 = vmatpush1.msra.mxu0 0.0
        %301 = vmatprep.subr.mxu0 0.0
        %302 = vmatpush1.msra.mxu0 0.0
        %303 = vmatprep.subr.mxu0 0.0
        %304 = vmatpush1.msra.mxu0 0.0
        %305 = vmatprep.subr.mxu0 0.0
        %306 = vmatpush1.msra.mxu0 0.0
        %307 = vmatprep.subr.mxu0 0.0
        %308 = vmatpush1.msra.mxu0 0.0
        %309 = vmatprep.mubr.f32.mxu0 0.0
        %v310 = vand.u32 %v239, 4294901760
        %v311 = vsub.f32 %v239, %v310
        %v312 = vand.u32 %v311, 4294901760
        %v313 = vsub.f32 %v311, %v312
        %v314 = vand.u32 %v313, 4294901760
        %315 = vmatmul.mubr.f32.gmra.mrb[0].mxu0 %v314
        %v316 = vpop.f32.mrb[0].mxu0
        %v317 = vadd.f32 %v236, %v316
        %v318 = vpop.f32.mrb[0].mxu0
        %319 = vdwg.mxu0
        %320 = vmatprep.subr.mxu0 0.0
        %v321 = vand.u32 %v232, 4294901760
        %v322 = vsub.f32 %v232, %v321
        %v323 = vand.u32 %v322, 4294901760
        %v324 = vsub.f32 %v322, %v323
        %v325 = vand.u32 %v324, 4294901760
        %326 = vmatpush1.msra.mxu0 %v325
        %327 = vmatprep.subr.mxu0 0.0
        %v328 = vand.u32 %v233, 4294901760
        %v329 = vsub.f32 %v233, %v328
        %v330 = vand.u32 %v329, 4294901760
        %v331 = vsub.f32 %v329, %v330
        %v332 = vand.u32 %v331, 4294901760
        %333 = vmatpush1.msra.mxu0 %v332
        %334 = vmatprep.subr.mxu0 0.0
        %v335 = vand.u32 %v234, 4294901760
        %v336 = vsub.f32 %v234, %v335
        %v337 = vand.u32 %v336, 4294901760
        %v338 = vsub.f32 %v336, %v337
        %v339 = vand.u32 %v338, 4294901760
        %340 = vmatpush1.msra.mxu0 %v339
        %341 = vmatprep.subr.mxu0 0.0
        %v342 = vand.u32 %v235, 4294901760
        %v343 = vsub.f32 %v235, %v342
        %v344 = vand.u32 %v343, 4294901760
        %v345 = vsub.f32 %v343, %v344
        %v346 = vand.u32 %v345, 4294901760
        %347 = vmatpush1.msra.mxu0 %v346
        %348 = vmatprep.subr.mxu0 0.0
        %349 = vmatpush1.msra.mxu0 0.0
        %350 = vmatprep.subr.mxu0 0.0
        %351 = vmatpush1.msra.mxu0 0.0
        %352 = vmatprep.subr.mxu0 0.0
        %353 = vmatpush1.msra.mxu0 0.0
        %354 = vmatprep.subr.mxu0 0.0
        %355 = vmatpush1.msra.mxu0 0.0
        %356 = vmatprep.subr.mxu0 0.0
        %357 = vmatpush1.msra.mxu0 0.0
        %358 = vmatprep.subr.mxu0 0.0
        %359 = vmatpush1.msra.mxu0 0.0
        %360 = vmatprep.subr.mxu0 0.0
        %361 = vmatpush1.msra.mxu0 0.0
        %362 = vmatprep.subr.mxu0 0.0
        %363 = vmatpush1.msra.mxu0 0.0
        %364 = vmatprep.subr.mxu0 0.0
        %365 = vmatpush1.msra.mxu0 0.0
        %366 = vmatprep.subr.mxu0 0.0
        %367 = vmatpush1.msra.mxu0 0.0
        %368 = vmatprep.subr.mxu0 0.0
        %369 = vmatpush1.msra.mxu0 0.0
        %370 = vmatprep.subr.mxu0 0.0
        %371 = vmatpush1.msra.mxu0 0.0
        %372 = vmatprep.subr.mxu0 0.0
        %373 = vmatpush1.msra.mxu0 0.0
        %374 = vmatprep.subr.mxu0 0.0
        %375 = vmatpush1.msra.mxu0 0.0
        %376 = vmatprep.subr.mxu0 0.0
        %377 = vmatpush1.msra.mxu0 0.0
        %378 = vmatprep.subr.mxu0 0.0
        %379 = vmatpush1.msra.mxu0 0.0
        %380 = vmatprep.subr.mxu0 0.0
        %381 = vmatpush1.msra.mxu0 0.0
        %382 = vmatprep.subr.mxu0 0.0
        %383 = vmatpush1.msra.mxu0 0.0
        %384 = vmatprep.subr.mxu0 0.0
        %385 = vmatpush1.msra.mxu0 0.0
        %386 = vmatprep.subr.mxu0 0.0
        %387 = vmatpush1.msra.mxu0 0.0
        %388 = vmatprep.subr.mxu0 0.0
        %389 = vmatpush1.msra.mxu0 0.0
        %390 = vmatprep.subr.mxu0 0.0
        %391 = vmatpush1.msra.mxu0 0.0
        %392 = vmatprep.subr.mxu0 0.0
        %393 = vmatpush1.msra.mxu0 0.0
        %394 = vmatprep.subr.mxu0 0.0
        %395 = vmatpush1.msra.mxu0 0.0
        %396 = vmatprep.subr.mxu0 0.0
        %397 = vmatpush1.msra.mxu0 0.0
        %398 = vmatprep.subr.mxu0 0.0
        %399 = vmatpush1.msra.mxu0 0.0
        %400 = vmatprep.subr.mxu0 0.0
        %401 = vmatpush1.msra.mxu0 0.0
        %402 = vmatprep.subr.mxu0 0.0
        %403 = vmatpush1.msra.mxu0 0.0
        %404 = vmatprep.mubr.f32.mxu0 0.0
        %v405 = vand.u32 %v239, 4294901760
        %406 = vmatmul.mubr.f32.gmra.mrb[0].mxu0 %v405
        %v407 = vpop.f32.mrb[0].mxu0
        %v408 = vadd.f32 %v317, %v407
        %v409 = vpop.f32.mrb[0].mxu0
        %410 = vdwg.mxu0
        %411 = vmatprep.subr.mxu0 0.0
        %v412 = vand.u32 %v232, 4294901760
        %v413 = vsub.f32 %v232, %v412
        %414 = vmatpush1.msra.mxu0 %v413
        %415 = vmatprep.subr.mxu0 0.0
        %v416 = vand.u32 %v233, 4294901760
        %v417 = vsub.f32 %v233, %v416
        %418 = vmatpush1.msra.mxu0 %v417
        %419 = vmatprep.subr.mxu0 0.0
        %v420 = vand.u32 %v234, 4294901760
        %v421 = vsub.f32 %v234, %v420
        %422 = vmatpush1.msra.mxu0 %v421
        %423 = vmatprep.subr.mxu0 0.0
        %v424 = vand.u32 %v235, 4294901760
        %v425 = vsub.f32 %v235, %v424
        %426 = vmatpush1.msra.mxu0 %v425
        %427 = vmatprep.subr.mxu0 0.0
        %428 = vmatpush1.msra.mxu0 0.0
        %429 = vmatprep.subr.mxu0 0.0
        %430 = vmatpush1.msra.mxu0 0.0
        %431 = vmatprep.subr.mxu0 0.0
        %432 = vmatpush1.msra.mxu0 0.0
        %433 = vmatprep.subr.mxu0 0.0
        %434 = vmatpush1.msra.mxu0 0.0
        %435 = vmatprep.subr.mxu0 0.0
        %436 = vmatpush1.msra.mxu0 0.0
        %437 = vmatprep.subr.mxu0 0.0
        %438 = vmatpush1.msra.mxu0 0.0
        %439 = vmatprep.subr.mxu0 0.0
        %440 = vmatpush1.msra.mxu0 0.0
        %441 = vmatprep.subr.mxu0 0.0
        %442 = vmatpush1.msra.mxu0 0.0
        %443 = vmatprep.subr.mxu0 0.0
        %444 = vmatpush1.msra.mxu0 0.0
        %445 = vmatprep.subr.mxu0 0.0
        %446 = vmatpush1.msra.mxu0 0.0
        %447 = vmatprep.subr.mxu0 0.0
        %448 = vmatpush1.msra.mxu0 0.0
        %449 = vmatprep.subr.mxu0 0.0
        %450 = vmatpush1.msra.mxu0 0.0
        %451 = vmatprep.subr.mxu0 0.0
        %452 = vmatpush1.msra.mxu0 0.0
        %453 = vmatprep.subr.mxu0 0.0
        %454 = vmatpush1.msra.mxu0 0.0
        %455 = vmatprep.subr.mxu0 0.0
        %456 = vmatpush1.msra.mxu0 0.0
        %457 = vmatprep.subr.mxu0 0.0
        %458 = vmatpush1.msra.mxu0 0.0
        %459 = vmatprep.subr.mxu0 0.0
        %460 = vmatpush1.msra.mxu0 0.0
        %461 = vmatprep.subr.mxu0 0.0
        %462 = vmatpush1.msra.mxu0 0.0
        %463 = vmatprep.subr.mxu0 0.0
        %464 = vmatpush1.msra.mxu0 0.0
        %465 = vmatprep.subr.mxu0 0.0
        %466 = vmatpush1.msra.mxu0 0.0
        %467 = vmatprep.subr.mxu0 0.0
        %468 = vmatpush1.msra.mxu0 0.0
        %469 = vmatprep.subr.mxu0 0.0
        %470 = vmatpush1.msra.mxu0 0.0
        %471 = vmatprep.subr.mxu0 0.0
        %472 = vmatpush1.msra.mxu0 0.0
        %473 = vmatprep.subr.mxu0 0.0
        %474 = vmatpush1.msra.mxu0 0.0
        %475 = vmatprep.subr.mxu0 0.0
        %476 = vmatpush1.msra.mxu0 0.0
        %477 = vmatprep.subr.mxu0 0.0
        %478 = vmatpush1.msra.mxu0 0.0
        %479 = vmatprep.subr.mxu0 0.0
        %480 = vmatpush1.msra.mxu0 0.0
        %481 = vmatprep.subr.mxu0 0.0
        %482 = vmatpush1.msra.mxu0 0.0
        %483 = vmatprep.mubr.f32.mxu0 0.0
        %v484 = vand.u32 %v239, 4294901760
        %v485 = vsub.f32 %v239, %v484
        %486 = vmatmul.mubr.f32.gmra.mrb[0].mxu0 %v485
        %v487 = vpop.f32.mrb[0].mxu0
        %v488 = vadd.f32 %v408, %v487
        %v489 = vpop.f32.mrb[0].mxu0
        %490 = vdwg.mxu0
        %491 = vmatprep.subr.mxu0 0.0
        %v492 = vand.u32 %v232, 4294901760
        %493 = vmatpush1.msra.mxu0 %v492
        %494 = vmatprep.subr.mxu0 0.0
        %v495 = vand.u32 %v233, 4294901760
        %496 = vmatpush1.msra.mxu0 %v495
        %497 = vmatprep.subr.mxu0 0.0
        %v498 = vand.u32 %v234, 4294901760
        %499 = vmatpush1.msra.mxu0 %v498
        %500 = vmatprep.subr.mxu0 0.0
        %v501 = vand.u32 %v235, 4294901760
        %502 = vmatpush1.msra.mxu0 %v501
        %503 = vmatprep.subr.mxu0 0.0
        %504 = vmatpush1.msra.mxu0 0.0
        %505 = vmatprep.subr.mxu0 0.0
        %506 = vmatpush1.msra.mxu0 0.0
        %507 = vmatprep.subr.mxu0 0.0
        %508 = vmatpush1.msra.mxu0 0.0
        %509 = vmatprep.subr.mxu0 0.0
        %510 = vmatpush1.msra.mxu0 0.0
        %511 = vmatprep.subr.mxu0 0.0
        %512 = vmatpush1.msra.mxu0 0.0
        %513 = vmatprep.subr.mxu0 0.0
        %514 = vmatpush1.msra.mxu0 0.0
        %515 = vmatprep.subr.mxu0 0.0
        %516 = vmatpush1.msra.mxu0 0.0
        %517 = vmatprep.subr.mxu0 0.0
        %518 = vmatpush1.msra.mxu0 0.0
        %519 = vmatprep.subr.mxu0 0.0
        %520 = vmatpush1.msra.mxu0 0.0
        %521 = vmatprep.subr.mxu0 0.0
        %522 = vmatpush1.msra.mxu0 0.0
        %523 = vmatprep.subr.mxu0 0.0
        %524 = vmatpush1.msra.mxu0 0.0
        %525 = vmatprep.subr.mxu0 0.0
        %526 = vmatpush1.msra.mxu0 0.0
        %527 = vmatprep.subr.mxu0 0.0
        %528 = vmatpush1.msra.mxu0 0.0
        %529 = vmatprep.subr.mxu0 0.0
        %530 = vmatpush1.msra.mxu0 0.0
        %531 = vmatprep.subr.mxu0 0.0
        %532 = vmatpush1.msra.mxu0 0.0
        %533 = vmatprep.subr.mxu0 0.0
        %534 = vmatpush1.msra.mxu0 0.0
        %535 = vmatprep.subr.mxu0 0.0
        %536 = vmatpush1.msra.mxu0 0.0
        %537 = vmatprep.subr.mxu0 0.0
        %538 = vmatpush1.msra.mxu0 0.0
        %539 = vmatprep.subr.mxu0 0.0
        %540 = vmatpush1.msra.mxu0 0.0
        %541 = vmatprep.subr.mxu0 0.0
        %542 = vmatpush1.msra.mxu0 0.0
        %543 = vmatprep.subr.mxu0 0.0
        %544 = vmatpush1.msra.mxu0 0.0
        %545 = vmatprep.subr.mxu0 0.0
        %546 = vmatpush1.msra.mxu0 0.0
        %547 = vmatprep.subr.mxu0 0.0
        %548 = vmatpush1.msra.mxu0 0.0
        %549 = vmatprep.subr.mxu0 0.0
        %550 = vmatpush1.msra.mxu0 0.0
        %551 = vmatprep.subr.mxu0 0.0
        %552 = vmatpush1.msra.mxu0 0.0
        %553 = vmatprep.subr.mxu0 0.0
        %554 = vmatpush1.msra.mxu0 0.0
        %555 = vmatprep.subr.mxu0 0.0
        %556 = vmatpush1.msra.mxu0 0.0
        %557 = vmatprep.subr.mxu0 0.0
        %558 = vmatpush1.msra.mxu0 0.0
        %559 = vmatprep.mubr.f32.mxu0 0.0
        %v560 = vand.u32 %v239, 4294901760
        %v561 = vsub.f32 %v239, %v560
        %v562 = vand.u32 %v561, 4294901760
        %563 = vmatmul.mubr.f32.gmra.mrb[0].mxu0 %v562
        %v564 = vpop.f32.mrb[0].mxu0
        %v565 = vadd.f32 %v488, %v564
        %v566 = vpop.f32.mrb[0].mxu0
        %567 = vdwg.mxu0
        %568 = vmatprep.subr.mxu0 0.0
        %v569 = vand.u32 %v232, 4294901760
        %v570 = vsub.f32 %v232, %v569
        %v571 = vand.u32 %v570, 4294901760
        %572 = vmatpush1.msra.mxu0 %v571
        %573 = vmatprep.subr.mxu0 0.0
        %v574 = vand.u32 %v233, 4294901760
        %v575 = vsub.f32 %v233, %v574
        %v576 = vand.u32 %v575, 4294901760
        %577 = vmatpush1.msra.mxu0 %v576
        %578 = vmatprep.subr.mxu0 0.0
        %v579 = vand.u32 %v234, 4294901760
        %v580 = vsub.f32 %v234, %v579
        %v581 = vand.u32 %v580, 4294901760
        %582 = vmatpush1.msra.mxu0 %v581
        %583 = vmatprep.subr.mxu0 0.0
        %v584 = vand.u32 %v235, 4294901760
        %v585 = vsub.f32 %v235, %v584
        %v586 = vand.u32 %v585, 4294901760
        %587 = vmatpush1.msra.mxu0 %v586
        %588 = vmatprep.subr.mxu0 0.0
        %589 = vmatpush1.msra.mxu0 0.0
        %590 = vmatprep.subr.mxu0 0.0
        %591 = vmatpush1.msra.mxu0 0.0
        %592 = vmatprep.subr.mxu0 0.0
        %593 = vmatpush1.msra.mxu0 0.0
        %594 = vmatprep.subr.mxu0 0.0
        %595 = vmatpush1.msra.mxu0 0.0
        %596 = vmatprep.subr.mxu0 0.0
        %597 = vmatpush1.msra.mxu0 0.0
        %598 = vmatprep.subr.mxu0 0.0
        %599 = vmatpush1.msra.mxu0 0.0
        %600 = vmatprep.subr.mxu0 0.0
        %601 = vmatpush1.msra.mxu0 0.0
        %602 = vmatprep.subr.mxu0 0.0
        %603 = vmatpush1.msra.mxu0 0.0
        %604 = vmatprep.subr.mxu0 0.0
        %605 = vmatpush1.msra.mxu0 0.0
        %606 = vmatprep.subr.mxu0 0.0
        %607 = vmatpush1.msra.mxu0 0.0
        %608 = vmatprep.subr.mxu0 0.0
        %609 = vmatpush1.msra.mxu0 0.0
        %610 = vmatprep.subr.mxu0 0.0
        %611 = vmatpush1.msra.mxu0 0.0
        %612 = vmatprep.subr.mxu0 0.0
        %613 = vmatpush1.msra.mxu0 0.0
        %614 = vmatprep.subr.mxu0 0.0
        %615 = vmatpush1.msra.mxu0 0.0
        %616 = vmatprep.subr.mxu0 0.0
        %617 = vmatpush1.msra.mxu0 0.0
        %618 = vmatprep.subr.mxu0 0.0
        %619 = vmatpush1.msra.mxu0 0.0
        %620 = vmatprep.subr.mxu0 0.0
        %621 = vmatpush1.msra.mxu0 0.0
        %622 = vmatprep.subr.mxu0 0.0
        %623 = vmatpush1.msra.mxu0 0.0
        %624 = vmatprep.subr.mxu0 0.0
        %625 = vmatpush1.msra.mxu0 0.0
        %626 = vmatprep.subr.mxu0 0.0
        %627 = vmatpush1.msra.mxu0 0.0
        %628 = vmatprep.subr.mxu0 0.0
        %629 = vmatpush1.msra.mxu0 0.0
        %630 = vmatprep.subr.mxu0 0.0
        %631 = vmatpush1.msra.mxu0 0.0
        %632 = vmatprep.subr.mxu0 0.0
        %633 = vmatpush1.msra.mxu0 0.0
        %634 = vmatprep.subr.mxu0 0.0
        %635 = vmatpush1.msra.mxu0 0.0
        %636 = vmatprep.subr.mxu0 0.0
        %637 = vmatpush1.msra.mxu0 0.0
        %638 = vmatprep.subr.mxu0 0.0
        %639 = vmatpush1.msra.mxu0 0.0
        %640 = vmatprep.subr.mxu0 0.0
        %641 = vmatpush1.msra.mxu0 0.0
        %642 = vmatprep.subr.mxu0 0.0
        %643 = vmatpush1.msra.mxu0 0.0
        %644 = vmatprep.mubr.f32.mxu0 0.0
        %v645 = vand.u32 %v239, 4294901760
        %646 = vmatmul.mubr.f32.gmra.mrb[0].mxu0 %v645
        %v647 = vpop.f32.mrb[0].mxu0
        %v648 = vadd.f32 %v565, %v647
        %v649 = vpop.f32.mrb[0].mxu0
        %650 = vdwg.mxu0
        %651 = vmatprep.subr.mxu0 0.0
        %v652 = vand.u32 %v232, 4294901760
        %653 = vmatpush1.msra.mxu0 %v652
        %654 = vmatprep.subr.mxu0 0.0
        %v655 = vand.u32 %v233, 4294901760
        %656 = vmatpush1.msra.mxu0 %v655
        %657 = vmatprep.subr.mxu0 0.0
        %v658 = vand.u32 %v234, 4294901760
        %659 = vmatpush1.msra.mxu0 %v658
        %660 = vmatprep.subr.mxu0 0.0
        %v661 = vand.u32 %v235, 4294901760
        %662 = vmatpush1.msra.mxu0 %v661
        %663 = vmatprep.subr.mxu0 0.0
        %664 = vmatpush1.msra.mxu0 0.0
        %665 = vmatprep.subr.mxu0 0.0
        %666 = vmatpush1.msra.mxu0 0.0
        %667 = vmatprep.subr.mxu0 0.0
        %668 = vmatpush1.msra.mxu0 0.0
        %669 = vmatprep.subr.mxu0 0.0
        %670 = vmatpush1.msra.mxu0 0.0
        %671 = vmatprep.subr.mxu0 0.0
        %672 = vmatpush1.msra.mxu0 0.0
        %673 = vmatprep.subr.mxu0 0.0
        %674 = vmatpush1.msra.mxu0 0.0
        %675 = vmatprep.subr.mxu0 0.0
        %676 = vmatpush1.msra.mxu0 0.0
        %677 = vmatprep.subr.mxu0 0.0
        %678 = vmatpush1.msra.mxu0 0.0
        %679 = vmatprep.subr.mxu0 0.0
        %680 = vmatpush1.msra.mxu0 0.0
        %681 = vmatprep.subr.mxu0 0.0
        %682 = vmatpush1.msra.mxu0 0.0
        %683 = vmatprep.subr.mxu0 0.0
        %684 = vmatpush1.msra.mxu0 0.0
        %685 = vmatprep.subr.mxu0 0.0
        %686 = vmatpush1.msra.mxu0 0.0
        %687 = vmatprep.subr.mxu0 0.0
        %688 = vmatpush1.msra.mxu0 0.0
        %689 = vmatprep.subr.mxu0 0.0
        %690 = vmatpush1.msra.mxu0 0.0
        %691 = vmatprep.subr.mxu0 0.0
        %692 = vmatpush1.msra.mxu0 0.0
        %693 = vmatprep.subr.mxu0 0.0
        %694 = vmatpush1.msra.mxu0 0.0
        %695 = vmatprep.subr.mxu0 0.0
        %696 = vmatpush1.msra.mxu0 0.0
        %697 = vmatprep.subr.mxu0 0.0
        %698 = vmatpush1.msra.mxu0 0.0
        %699 = vmatprep.subr.mxu0 0.0
        %700 = vmatpush1.msra.mxu0 0.0
        %701 = vmatprep.subr.mxu0 0.0
        %702 = vmatpush1.msra.mxu0 0.0
        %703 = vmatprep.subr.mxu0 0.0
        %704 = vmatpush1.msra.mxu0 0.0
        %705 = vmatprep.subr.mxu0 0.0
        %706 = vmatpush1.msra.mxu0 0.0
        %707 = vmatprep.subr.mxu0 0.0
        %708 = vmatpush1.msra.mxu0 0.0
        %709 = vmatprep.subr.mxu0 0.0
        %710 = vmatpush1.msra.mxu0 0.0
        %711 = vmatprep.subr.mxu0 0.0
        %712 = vmatpush1.msra.mxu0 0.0
        %713 = vmatprep.subr.mxu0 0.0
        %714 = vmatpush1.msra.mxu0 0.0
        %715 = vmatprep.subr.mxu0 0.0
        %716 = vmatpush1.msra.mxu0 0.0
        %717 = vmatprep.subr.mxu0 0.0
        %718 = vmatpush1.msra.mxu0 0.0
        %719 = vmatprep.mubr.f32.mxu0 0.0
        %v720 = vand.u32 %v239, 4294901760
        %721 = vmatmul.mubr.f32.gmra.mrb[0].mxu0 %v720
        %v722 = vpop.f32.mrb[0].mxu0
        %v723 = vadd.f32 %v648, %v722
        %v724 = vpop.f32.mrb[0].mxu0
        %725 = vdwg.mxu0
        %726 = vst [vmem:[%s211] sm:$0xff] %v723
        %s727 = sand.u32 %s115, 1
        %s728 = scalar_lea.sflag [#allocation4], %s727
        %s729 = sand.u32 %s115, 1
        %s730 = smul.addr %s729, 8
        %s731 = scalar_lea.vmem [#allocation5], %s730
        // Predicated region
        $region37: #{tpu_custom_call.1} parent=31 // pred_check
          %p732 = pneg %p125
        $region38: #{tpu_custom_call.1} parent=31 // pred_check_branch
          %734 = sbr.rel (%p732) target = $region40
        $region39: #{tpu_custom_call.1} parent=31 // pred_region
          %s736 = ssub.s32 128, 128
          %737 = vsyncadd %s728, %s736
          %s738 = sadd.s32 %s22, %s23
          %s739 = smul.addr %s738, 128
          %s740 = scalar_lea.hbm %s3, %s739
          %s742 = sshll.u32 %s731, 4
          %s743 = int_to_ptr.vmem [resolvable:$true] %s742
          %745 = dma.vmem_to_hbm [thread:$0]  %s743, 128, %s740, %s728
        $region40: #{tpu_custom_call.1} parent=31 // pred_fallthru
          _
      $region32: #{tpu_custom_call.1} parent=5 // pred_fallthru
        _
      %p746 = scmp.le.s32.totalorder 2, %s13
      // Predicated region
      $region41: #{tpu_custom_call.1} parent=5 // pred_check
        %p747 = pneg %p746
      $region42: #{tpu_custom_call.1} parent=5 // pred_check_branch
        %749 = sbr.rel (%p747) target = $region44
      $region43: #{tpu_custom_call.1} parent=5 // pred_region
        %s750 = ssub.s32 %s13, 2
        // Predicated region
        $region45: #{tpu_custom_call.1} parent=43 // pred_check
          %p751 = pneg %p131
        $region46: #{tpu_custom_call.1} parent=43 // pred_check_branch
          %753 = sbr.rel (%p751) target = $region48
        $region47: #{tpu_custom_call.1} parent=43 // pred_region
          %s754 = sand.u32 %s116, 1
          %s755 = scalar_lea.sflag [#allocation4], %s754
          %s756 = sand.u32 %s116, 1
          %s757 = smul.addr %s756, 8
          %s758 = scalar_lea.vmem [#allocation5], %s757
          %759 = dma.done %s755, 128
        $region48: #{tpu_custom_call.1} parent=43 // pred_fallthru
          _
      $region44: #{tpu_custom_call.1} parent=5 // pred_fallthru
        _
    $region6: #{tpu_custom_call.1} parent=1 // loop_footer
      %s17 = sadd.s32 1, %s13
    $region7: #{tpu_custom_call.1} parent=1 // loop_footer_branch
      %12 = sbr.rel target = $region3
    $region8: #{tpu_custom_call.1} parent=1 // loop_exit
      _
    %760 = vsyncpa [#allocation3], 1
    %s761 = scalar_lea.sflag [#allocation3], 1
    %762 = vsyncpa %s761, 1
    %763 = vsyncpa [#allocation4], 1
    %s764 = scalar_lea.sflag [#allocation4], 1
    %765 = vsyncpa %s764, 1

</llo_original>
